<compile_context>
chip_gen: v6e
topology: v6e:2x2x1
jax: 0.10.0
libtpu: 0.0.40
codegen_flags: <defaults>
</compile_context>

<pallas_src>
import functools

import numpy as np

import jax
import jax.numpy as jnp
from jax.experimental import pallas as pl
from jax.experimental.pallas import tpu as pltpu


def _round_up(x, m):
    return ((x + m - 1) // m) * m


# ----------------------------------------------------------------------------
# Pallas kernels
# ----------------------------------------------------------------------------
def _latent_mix_kernel(env_ref, gmax_ref, mt_ref, gg_ref, lat_ref, out_ref):
    """Grouped softmax (stable per-group max) + fused block-diagonal matmul.

    env_ref:  [Tt, SGH]   latent-envelope columns of x (this T tile)
    gmax_ref: [Tt, SG]    compact per-group max (broadcast in-kernel)
    mt_ref:   [SG, SGH]   one-hot group->feature membership (constant)
    gg_ref:   [SGH, SGH]  block-ones same-group matrix (constant)
    lat_ref:  [SGH, WLp]  block-diagonal latent bank, pre-scaled by 1/(G+1e-8)
    out_ref:  [Tt, WLp]   WLp = pad128(S*W*L)  (lane-dense output)
    """
    env = env_ref[...]
    # Broadcast the compact per-group max back to feature columns (K=SG matmul).
    gmax = jnp.dot(gmax_ref[...], mt_ref[...], preferred_element_type=jnp.float32)
    e = jnp.exp(env - gmax)                                    # stable: <= 1
    # Per-group sums broadcast back to columns: single matmul with GG = M @ Mt.
    denom = jnp.dot(e, gg_ref[...], preferred_element_type=jnp.float32)
    env_sm = e * pl.reciprocal(denom, approx=True)             # denom >= 1
    # (Constant 1/(G+1e-8) normalization already folded into lat_ref.)
    out_ref[...] = jnp.dot(env_sm, lat_ref[...],
                           preferred_element_type=jnp.float32).astype(out_ref.dtype)


def _noise_kernel(mu_ref, sig_ref, bmap_ref, n_ref, out_ref, *, taps):
    """One column tile of every noise level: out = mu_map + sig_map * filt(noise).

    mu_ref/sig_ref: [Tp, n_noise]
    bmap_ref:       [n_noise, Ct]  one-hot level-membership of each column
    n_ref:          [Tp, Ct]       flattened Gaussian noise (this column tile)
    out_ref:        [Tp, Ct]

    The temporal Gaussian filter is banded (17 taps, radius 8) and implemented
    with sublane rolls instead of a dense [T, T] circulant matmul.
    """
    mu_full = jnp.dot(mu_ref[...], bmap_ref[...], preferred_element_type=jnp.float32)
    sig_full = jnp.dot(sig_ref[...], bmap_ref[...], preferred_element_type=jnp.float32)

    n = n_ref[...]
    Tp = n.shape[0]
    R = (len(taps) - 1) // 2
    filt = taps[R] * n
    for d in range(1, R + 1):
        # Symmetric taps; python-int shifts kept non-negative via mod Tp.
        filt = filt + taps[R + d] * pltpu.roll(n, shift=d % Tp, axis=0)
        filt = filt + taps[R - d] * pltpu.roll(n, shift=(-d) % Tp, axis=0)

    out_ref[...] = mu_full + sig_full * filt


# ----------------------------------------------------------------------------
# One-time parameter / constant preparation (hoisted out of the forward trace)
# ----------------------------------------------------------------------------
def prepare_latent_consts(latents, S, G, H, lane=128):
    """Block-diagonal pre-scaled latent bank + group-membership constants."""
    GH = G * H
    SG = S * G
    SGH = S * GH
    n_ws, L = int(latents.shape[1]), int(latents.shape[2])
    W = n_ws // S
    WL = S * W * L
    WLp = _round_up(max(WL, lane), lane)

    # env.sum(dim=(1,2)) is exactly G (sum of G per-group softmaxes), so the
    # reference normalization is the constant 1/(G + 1e-8): fold it in here.
    scale = 1.0 / (G + 1e-8)
    lat = np.asarray(latents, dtype=np.float32)
    lat_bd = np.zeros((SGH, WLp), dtype=np.float32)
    for i in range(S):
        blk = lat[i * GH:(i + 1) * GH, i * W:(i + 1) * W, :].reshape(GH, W * L)
        lat_bd[i * GH:(i + 1) * GH, i * W * L:(i + 1) * W * L] = blk * scale

    # Group membership: column c belongs to global group c // H.
    g_of_f = np.arange(SGH) // H
    Mt = (g_of_f[None, :] == np.arange(SG)[:, None]).astype(np.float32)  # [SG,SGH]
    GG = (g_of_f[None, :] == g_of_f[:, None]).astype(np.float32)         # [SGH,SGH]

    return dict(lat_bd=jnp.asarray(lat_bd), Mt=jnp.asarray(Mt), GG=jnp.asarray(GG),
                S=S, G=G, H=H, W=W, L=L, n_ws=n_ws, SG=SG, SGH=SGH, WLp=WLp)


def prepare_noise_consts(n_noise, T, sigma=2.0,
                         vmem_budget_bytes=12 << 20, max_c_tile=512):
    """Level membership map, filter taps and tiling choices for the noise path."""
    if n_noise == 0:
        return dict(n_noise=0)
    sizes = [2 ** (i + 2) for i in range(n_noise)]
    counts = [s * s for s in sizes]
    offsets = [int(o) for o in np.cumsum([0] + counts)]
    C = offsets[-1]
    Tp = _round_up(T, 8)

    # Column-tile size: VMEM-budgeted, >=2 grid steps when possible (dual TC).
    cpad0 = _round_up(C, 128)
    ct_budget = max(128, (vmem_budget_bytes // (16 * Tp)) // 128 * 128)
    ct_half = max(128, (cpad0 // 2) // 128 * 128)
    Ct = int(min(max_c_tile, ct_budget, ct_half, cpad0))
    Cpad = _round_up(C, Ct)
    # TODO(synk): for very large T (Tp*Ct*16 B > VMEM even at Ct=128) the filter
    # needs a T-tiled grid with 2*R halo rows instead of whole-T column blocks.

    bmap = np.zeros((n_noise, Cpad), dtype=np.float32)
    for i in range(n_noise):
        bmap[i, offsets[i]:offsets[i + 1]] = 1.0

    # TODO(synk): the reference `gaussian_filter` helper is external; we assume
    # a periodic temporal Gaussian (sigma=2, radius=int(4*sigma+0.5)=8).  It
    # acts on fresh random noise under no_grad, so exact taps / boundary mode
    # are not semantically observable.
    radius = int(4.0 * sigma + 0.5)
    taps = np.exp(-0.5 * (np.arange(-radius, radius + 1) / sigma) ** 2)
    taps = taps / taps.sum()

    return dict(n_noise=n_noise, sizes=sizes, offsets=offsets, C=C,
                Cpad=Cpad, Ct=Ct, Tp=Tp,
                bmap=jnp.asarray(bmap), taps=tuple(float(t) for t in taps))


# ----------------------------------------------------------------------------
# Wrappers
# ----------------------------------------------------------------------------
def latent_mix(x_lat, consts, *, out_dtype=jnp.float32,
               max_t_tile=1024, vmem_budget_bytes=16 << 20):
    """x_lat: [T, SGH] -> [T, WLp] (lane-dense) mixed latents.

    out_dtype can be set to jnp.bfloat16 to halve store traffic (biggest win on
    v5e) when downstream tolerates it; f32 accumulation is kept either way.
    """
    T, SGH = x_lat.shape
    SG, H, WLp = consts["SG"], consts["H"], consts["WLp"]

    x_lat = x_lat.astype(jnp.float32)
    # Compact per-group max (exact softmax stabilizer), [T, SG] only.
    gmax = jnp.max(x_lat.reshape(T, SG, H), axis=2)

    # Tile choice: >=2 grid steps when T allows (dual TC on v7x), sized against
    # an explicit double-buffered VMEM budget (safe on v7x's smaller VMEM;
    # max_t_tile can be raised to 2048 on v5e/v6e's 128 MiB VMEM).
    itemsize = 4
    fixed = 2 * itemsize * (SGH * WLp + SG * SGH + SGH * SGH)
    per_row = 2 * itemsize * (SGH + SG + WLp)
    t_cap = max(8, (vmem_budget_bytes - fixed) // per_row // 8 * 8)
    t_half = _round_up(pl.cdiv(T, 2), 8)
    Tt = int(max(8, min(max_t_tile, t_cap, t_half)))
    Tpad = _round_up(T, Tt)
    if Tpad != T:
        x_lat = jnp.pad(x_lat, ((0, Tpad - T), (0, 0)))
        gmax = jnp.pad(gmax, ((0, Tpad - T), (0, 0)))

    flops = 2 * Tpad * SGH * (WLp + SGH + SG)
    bytes_accessed = itemsize * (Tpad * (SGH + SG + WLp)
                                 + SGH * WLp + SG * SGH + SGH * SGH)
    cost = pl.CostEstimate(flops=int(flops), transcendentals=int(Tpad * SGH),
                           bytes_accessed=int(bytes_accessed))

    out = pl.pallas_call(
        _latent_mix_kernel,
        out_shape=jax.ShapeDtypeStruct((Tpad, WLp), out_dtype),
        grid=(Tpad // Tt,),
        in_specs=[
            pl.BlockSpec((Tt, SGH), lambda i: (i, 0)),
            pl.BlockSpec((Tt, SG), lambda i: (i, 0)),
            pl.BlockSpec((SG, SGH), lambda i: (0, 0)),
            pl.BlockSpec((SGH, SGH), lambda i: (0, 0)),
            pl.BlockSpec((SGH, WLp), lambda i: (0, 0)),
        ],
        out_specs=pl.BlockSpec((Tt, WLp), lambda i: (i, 0)),
        compiler_params=pltpu.CompilerParams(
            dimension_semantics=("parallel",),
            vmem_limit_bytes=32 * 1024 * 1024),
        cost_estimate=cost,
    )(x_lat, gmax, consts["Mt"], consts["GG"], consts["lat_bd"])
    return out[:T]


def noise_pyramid(noise_envs, noise_key, consts):
    """noise_envs: [T, 2*n_noise] -> list of [T, 2**(i+2), 2**(i+2)] arrays."""
    n_noise = consts["n_noise"]
    if n_noise == 0:
        return []
    T = noise_envs.shape[0]
    Tp, Cpad, Ct = consts["Tp"], consts["Cpad"], consts["Ct"]
    sizes, offsets = consts["sizes"], consts["offsets"]

    mu = noise_envs[:, 0::2].astype(jnp.float32)    # [T, n_noise]
    sig = noise_envs[:, 1::2].astype(jnp.float32)   # [T, n_noise]
    if Tp != T:
        mu = jnp.pad(mu, ((0, Tp - T), (0, 0)))
        sig = jnp.pad(sig, ((0, Tp - T), (0, 0)))

    # TODO(synk): noise could be generated in-kernel (pltpu.prng_seed +
    # pltpu.stateful_normal) to save one [Tp, Cpad] HBM round trip; kept in the
    # wrapper so the stream stays a standard jax.random normal (non-semantic).
    n = jax.random.normal(noise_key, (Tp, Cpad), dtype=jnp.float32)

    ntaps = len(consts["taps"])
    flops = 2 * Tp * Cpad * (2 * n_noise + ntaps + 1)
    bytes_accessed = 4 * (2 * Tp * n_noise + n_noise * Cpad + 2 * Tp * Cpad)
    cost = pl.CostEstimate(flops=int(flops), transcendentals=0,
                           bytes_accessed=int(bytes_accessed))

    kernel = functools.partial(_noise_kernel, taps=consts["taps"])
    out = pl.pallas_call(
        kernel,
        out_shape=jax.ShapeDtypeStruct((Tp, Cpad), jnp.float32),
        grid=(Cpad // Ct,),
        in_specs=[
            pl.BlockSpec((Tp, n_noise), lambda j: (0, 0)),
            pl.BlockSpec((Tp, n_noise), lambda j: (0, 0)),
            pl.BlockSpec((n_noise, Ct), lambda j: (0, j)),
            pl.BlockSpec((Tp, Ct), lambda j: (0, j)),
        ],
        out_specs=pl.BlockSpec((Tp, Ct), lambda j: (0, j)),
        compiler_params=pltpu.CompilerParams(
            dimension_semantics=("parallel",),
            vmem_limit_bytes=32 * 1024 * 1024),
        cost_estimate=cost,
    )(mu, sig, consts["bmap"], n)

    return [out[:T, offsets[i]:offsets[i + 1]].reshape(T, sizes[i], sizes[i])
            for i in range(n_noise)]


def fixed_latent_noise_decoder_forward(x, lat_consts, noise_consts, noise_key):
    """JAX/Pallas equivalent of FixedLatentNoiseDecoder.forward.

    x: [T, S*G*H + 2*n_noise]
    returns: (mixed latents [T, n_ws, L], [noise_i of shape [T, 2**(i+2)]^2])
    """
    T = x.shape[0]
    SGH = lat_consts["SGH"]
    n_ws, L = lat_consts["n_ws"], lat_consts["L"]

    mixed_flat = latent_mix(x[:, :SGH], lat_consts)            # [T, WLp]
    mixed = mixed_flat[:, : n_ws * L].reshape(T, n_ws, L)

    noise = noise_pyramid(x[:, SGH:], noise_key, noise_consts)
    return mixed, noise


# ----------------------------------------------------------------------------
# Pure-JAX reference of the latent path (for the demo's correctness check)
# ----------------------------------------------------------------------------
def _reference_latents(x_lat, latents, S, G, H):
    T = x_lat.shape[0]
    GH = G * H
    n_ws, L = latents.shape[1], latents.shape[2]
    W = n_ws // S
    outs = []
    for i in range(S):
        env = x_lat[:, i * GH:(i + 1) * GH].reshape(T, G, H)
        env = jax.nn.softmax(env, axis=2)
        env = env / (env.sum(axis=(1, 2), keepdims=True) + 1e-8)
        lat = latents[i * GH:(i + 1) * GH, i * W:(i + 1) * W, :].reshape(G, H, W, L)
        outs.append(jnp.einsum('tgh,ghwl->twl', env, lat,
                               precision=jax.lax.Precision.HIGHEST))
    return jnp.concatenate(outs, axis=1)


# ----------------------------------------------------------------------------
# Demo
# ----------------------------------------------------------------------------
if __name__ == "__main__":
    S, G, H = 3, 3, 3          # module defaults
    T = 8                      # frames
    L = 32                     # latent feature dim
    n_ws = 6                   # => W = n_ws // S = 2
    n_noise = 3                # noise sizes 4, 8, 16

    key = jax.random.PRNGKey(0)
    k_lat, k_x, k_noise = jax.random.split(key, 3)

    latents = jax.random.normal(k_lat, (S * G * H, n_ws, L), dtype=jnp.float32)
    x = jax.random.normal(k_x, (T, S * G * H + 2 * n_noise), dtype=jnp.float32)

    # One-time (module-init-style) constant preparation.
    lat_consts = prepare_latent_consts(latents, S, G, H)
    noise_consts = prepare_noise_consts(n_noise, T)

    mixed, noise = fixed_latent_noise_decoder_forward(
        x, lat_consts, noise_consts, k_noise)
    jax.block_until_ready(mixed)
    for nz in noise:
        jax.block_until_ready(nz)

    # Shape / sanity checks.
    assert mixed.shape == (T, n_ws, L), mixed.shape
    assert [tuple(nz.shape) for nz in noise] == [(T, 4, 4), (T, 8, 8), (T, 16, 16)]
    assert bool(jnp.all(jnp.isfinite(mixed)))
    assert all(bool(jnp.all(jnp.isfinite(nz))) for nz in noise)

    # Numerical check of the latent path against a pure-JAX reference
    # (loose tolerance: approx reciprocal + MXU precision).
    ref = _reference_latents(x[:, :S * G * H], latents, S, G, H)
    assert bool(jnp.allclose(mixed, ref, rtol=2e-2, atol=2e-2)), (
        float(jnp.max(jnp.abs(mixed - ref))))

    print("KERNEL_OK")
</pallas_src>

<mosaic_0001>
module attributes {stable_mosaic.version = 11 : i64} {
  func.func @_latent_mix_kernel(%arg0: i32, %arg1: memref<8x27xf32, #tpu.memory_space<vmem>>, %arg2: memref<8x9xf32, #tpu.memory_space<vmem>>, %arg3: memref<9x27xf32, #tpu.memory_space<vmem>>, %arg4: memref<27x27xf32, #tpu.memory_space<vmem>>, %arg5: memref<27x256xf32, #tpu.memory_space<vmem>>, %arg6: memref<8x256xf32, #tpu.memory_space<vmem>>) attributes {dimension_semantics = [#tpu.dimension_semantics<parallel>], iteration_bounds = array<i64: 1>, scalar_prefetch = 0 : i64, scratch_operands = 0 : i64, tpu.core_type = #tpu.core_type<tc>, window_params = [{transform_indices = @transform_0, window_bounds = array<i64: 8, 27>}, {transform_indices = @transform_1, window_bounds = array<i64: 8, 9>}, {pipeline_mode = #tpu.pipeline_mode<synchronous>, transform_indices = @transform_2, window_bounds = array<i64: 9, 27>}, {pipeline_mode = #tpu.pipeline_mode<synchronous>, transform_indices = @transform_3, window_bounds = array<i64: 27, 27>}, {pipeline_mode = #tpu.pipeline_mode<synchronous>, transform_indices = @transform_4, window_bounds = array<i64: 27, 256>}, {transform_indices = @transform_5, window_bounds = array<i64: 8, 256>}]} {
    %c0 = arith.constant 0 : index
    %c0_0 = arith.constant 0 : index
    %0 = vector.load %arg1[%c0, %c0_0] : memref<8x27xf32, #tpu.memory_space<vmem>>, vector<8x27xf32>
    %c0_1 = arith.constant 0 : index
    %c0_2 = arith.constant 0 : index
    %1 = vector.load %arg2[%c0_1, %c0_2] : memref<8x9xf32, #tpu.memory_space<vmem>>, vector<8x9xf32>
    %c0_3 = arith.constant 0 : index
    %c0_4 = arith.constant 0 : index
    %2 = vector.load %arg3[%c0_3, %c0_4] : memref<9x27xf32, #tpu.memory_space<vmem>>, vector<9x27xf32>
    %cst = arith.constant dense<0.000000e+00> : vector<8x27xf32>
    %3 = tpu.matmul %1, %2, %cst {dimension_numbers = #tpu.dot_dimension_numbers<[1], [0], [0], [1], [0, 0, 1, 1], [], []>} : vector<8x9xf32>, vector<9x27xf32>, vector<8x27xf32> -> vector<8x27xf32>
    %4 = arith.subf %0, %3 : vector<8x27xf32>
    %5 = math.exp %4 : vector<8x27xf32>
    %c0_5 = arith.constant 0 : index
    %c0_6 = arith.constant 0 : index
    %6 = vector.load %arg4[%c0_5, %c0_6] : memref<27x27xf32, #tpu.memory_space<vmem>>, vector<27x27xf32>
    %cst_7 = arith.constant dense<0.000000e+00> : vector<8x27xf32>
    %7 = tpu.matmul %5, %6, %cst_7 {dimension_numbers = #tpu.dot_dimension_numbers<[1], [0], [0], [1], [0, 0, 1, 1], [], []>} : vector<8x27xf32>, vector<27x27xf32>, vector<8x27xf32> -> vector<8x27xf32>
    %8 = tpu.reciprocal %7 {approx = true} : vector<8x27xf32> -> vector<8x27xf32>
    %9 = arith.mulf %5, %8 : vector<8x27xf32>
    %c0_8 = arith.constant 0 : index
    %c0_9 = arith.constant 0 : index
    %10 = vector.load %arg5[%c0_8, %c0_9] : memref<27x256xf32, #tpu.memory_space<vmem>>, vector<27x256xf32>
    %cst_10 = arith.constant dense<0.000000e+00> : vector<8x256xf32>
    %11 = tpu.matmul %9, %10, %cst_10 {dimension_numbers = #tpu.dot_dimension_numbers<[1], [0], [0], [1], [0, 0, 1, 1], [], []>} : vector<8x27xf32>, vector<27x256xf32>, vector<8x256xf32> -> vector<8x256xf32>
    %c0_11 = arith.constant 0 : index
    %c0_12 = arith.constant 0 : index
    %12 = vector.load %arg6[%c0_11, %c0_12] : memref<8x256xf32, #tpu.memory_space<vmem>>, vector<8x256xf32>
    tpu.vector_store %arg6[%c0_11, %c0_12], %11 {strides = array<i32>} : memref<8x256xf32, #tpu.memory_space<vmem>>, vector<8x256xf32>,
    return
  }
  func.func @transform_0(%arg0: i32) -> (i32, i32) {
    %c0_i32 = arith.constant 0 : i32
    %c0_i32_0 = arith.constant 0 : i32
    return %arg0, %c0_i32 : i32, i32
  }
  func.func @transform_1(%arg0: i32) -> (i32, i32) {
    %c0_i32 = arith.constant 0 : i32
    %c0_i32_0 = arith.constant 0 : i32
    return %arg0, %c0_i32 : i32, i32
  }
  func.func @transform_2(%arg0: i32) -> (i32, i32) {
    %c0_i32 = arith.constant 0 : i32
    %c0_i32_0 = arith.constant 0 : i32
    %c0_i32_1 = arith.constant 0 : i32
    return %c0_i32, %c0_i32_0 : i32, i32
  }
  func.func @transform_3(%arg0: i32) -> (i32, i32) {
    %c0_i32 = arith.constant 0 : i32
    %c0_i32_0 = arith.constant 0 : i32
    %c0_i32_1 = arith.constant 0 : i32
    return %c0_i32, %c0_i32_0 : i32, i32
  }
  func.func @transform_4(%arg0: i32) -> (i32, i32) {
    %c0_i32 = arith.constant 0 : i32
    %c0_i32_0 = arith.constant 0 : i32
    %c0_i32_1 = arith.constant 0 : i32
    return %c0_i32, %c0_i32_0 : i32, i32
  }
  func.func @transform_5(%arg0: i32) -> (i32, i32) {
    %c0_i32 = arith.constant 0 : i32
    %c0_i32_0 = arith.constant 0 : i32
    return %arg0, %c0_i32 : i32, i32
  }
}

</mosaic_0001>

<llo_original>
// kernel: tpu_custom_call.1
$region0: #{tpu_custom_call.1}
  #allocation0 [shape = 'u32[]', space=smem, size = 0x4, offset = 0x4, fixed_abs, tag = 'smem constant byte address 0x4 - core index']
  #allocation1 [shape = 'u32[144,128]{1,0:T(1,128)}', space=vmem, size = 0x12000, scoped, tag = 'internal scratch']
  %s0 = inlined_call_operand.hbm [shape: f32[8,27], index: 0, kind: input, shape index: {}]
  %s1 = inlined_call_operand.hbm [shape: f32[8,9], index: 1, kind: input, shape index: {}]
  %s2 = inlined_call_operand.hbm [shape: f32[9,27], index: 2, kind: input, shape index: {}]
  %s3 = inlined_call_operand.hbm [shape: f32[27,27], index: 3, kind: input, shape index: {}]
  %s4 = inlined_call_operand.hbm [shape: f32[27,256], index: 4, kind: input, shape index: {}]
  %s5 = inlined_call_operand.hbm [shape: f32[8,256], index: 5, kind: output, shape index: {}]
  %s6 = sld [smem:[#allocation0]]
  $region50: #{tpu_custom_call.1} parent=0
    _
  %s8 = ssub.s32 1, %s6
  %s9 = scalar_select 0, %s8, %s6
  $region1: #{tpu_custom_call.1} parent=0
    #allocation2 [shape = 'u8[4096]{0}', space=vmem, size = 0x1000, scoped, tag = 'input window, operand 0, single buffered']
    #allocation3 [shape = 's32[1]{0}', space=sflag, size = 0x4, scoped, tag = 'scoped memory for tpu_custom_call.1']
    #allocation4 [shape = 's32[1]{0}', space=sflag, size = 0x4, scoped, tag = 'scoped memory for tpu_custom_call.1']
    #allocation5 [shape = 'u8[4096]{0}', space=vmem, size = 0x1000, scoped, tag = 'input window, operand 1, single buffered']
    #allocation6 [shape = 's32[1]{0}', space=sflag, size = 0x4, scoped, tag = 'scoped memory for tpu_custom_call.1']
    #allocation7 [shape = 'u8[8192]{0}', space=vmem, size = 0x2000, scoped, tag = 'input window, operand 2, single buffered']
    #allocation8 [shape = 'u8[16384]{0}', space=vmem, size = 0x4000, scoped, tag = 'input window, operand 3, single buffered']
    #allocation9 [shape = 's32[1]{0}', space=sflag, size = 0x4, scoped, tag = 'scoped memory for tpu_custom_call.1']
    #allocation10 [shape = 'u8[32768]{0}', space=vmem, size = 0x8000, scoped, tag = 'input window, operand 4, single buffered']
    #allocation11 [shape = 'u8[8192]{0}', space=vmem, size = 0x2000, scoped, tag = 'output window, operand 0, single buffered']
    %10 = vsyncpa [#allocation3], 0
    %11 = vsyncpa [#allocation6], 0
    %12 = vsyncpa [#allocation9], 0
    %13 = vsyncpa [#allocation4], 0
    // Predicated region
    $region2: #{tpu_custom_call.1} parent=1 // pred_check
      _
    $region3: #{tpu_custom_call.1} parent=1 // pred_check_branch
      %15 = sbr.rel (0) target = $region5
    $region4: #{tpu_custom_call.1} parent=1 // pred_region
      %s17 = ssub.s32 128, 128
      %18 = vsyncadd [#allocation3], %s17
      %s20 = sshll.u32 [#allocation2], 4
      %s21 = int_to_ptr.vmem [resolvable:$true] %s20
      %23 = dma.hbm_to_vmem [thread:$0]  %s0, 128, %s21, [#allocation3]
    $region5: #{tpu_custom_call.1} parent=1 // pred_fallthru
      _
    // Predicated region
    $region6: #{tpu_custom_call.1} parent=1 // pred_check
      _
    $region7: #{tpu_custom_call.1} parent=1 // pred_check_branch
      %25 = sbr.rel (0) target = $region9
    $region8: #{tpu_custom_call.1} parent=1 // pred_region
      %s27 = ssub.s32 128, 128
      %28 = vsyncadd [#allocation6], %s27
      %s30 = sshll.u32 [#allocation5], 4
      %s31 = int_to_ptr.vmem [resolvable:$true] %s30
      %33 = dma.hbm_to_vmem [thread:$0]  %s1, 128, %s31, [#allocation6]
    $region9: #{tpu_custom_call.1} parent=1 // pred_fallthru
      _
    // Predicated region
    $region10: #{tpu_custom_call.1} parent=1 // pred_check
      _
    $region11: #{tpu_custom_call.1} parent=1 // pred_check_branch
      %35 = sbr.rel (0) target = $region13
    $region12: #{tpu_custom_call.1} parent=1 // pred_region
      %s37 = ssub.s32 256, 256
      %38 = vsyncadd [#allocation6], %s37
      %s39 = sshll.u32 [#allocation7], 4
      %s40 = int_to_ptr.vmem [resolvable:$true] %s39
      %45 = dma.hbm_to_vmem [thread:$0]  %s2, 256, %s40, [#allocation6], 128, 128, 8
    $region13: #{tpu_custom_call.1} parent=1 // pred_fallthru
      _
    // Predicated region
    $region14: #{tpu_custom_call.1} parent=1 // pred_check
      _
    $region15: #{tpu_custom_call.1} parent=1 // pred_check_branch
      %47 = sbr.rel (0) target = $region17
    $region16: #{tpu_custom_call.1} parent=1 // pred_region
      %s49 = ssub.s32 512, 512
      %50 = vsyncadd [#allocation9], %s49
      %s51 = sshll.u32 [#allocation8], 4
      %s52 = int_to_ptr.vmem [resolvable:$true] %s51
      %57 = dma.hbm_to_vmem [thread:$0]  %s3, 512, %s52, [#allocation9], 128, 128, 8
    $region17: #{tpu_custom_call.1} parent=1 // pred_fallthru
      _
    // Predicated region
    $region18: #{tpu_custom_call.1} parent=1 // pred_check
      _
    $region19: #{tpu_custom_call.1} parent=1 // pred_check_branch
      %59 = sbr.rel (0) target = $region21
    $region20: #{tpu_custom_call.1} parent=1 // pred_region
      %s61 = ssub.s32 1024, 1024
      %62 = vsyncadd [#allocation9], %s61
      %s63 = sshll.u32 [#allocation10], 4
      %s64 = int_to_ptr.vmem [resolvable:$true] %s63
      %69 = dma.hbm_to_vmem [thread:$0]  %s4, 1024, %s64, [#allocation9], 256, 256, 16
    $region21: #{tpu_custom_call.1} parent=1 // pred_fallthru
      _
    // Predicated region
    $region22: #{tpu_custom_call.1} parent=1 // pred_check
      _
    $region23: #{tpu_custom_call.1} parent=1 // pred_check_branch
      %71 = sbr.rel (0) target = $region25
    $region24: #{tpu_custom_call.1} parent=1 // pred_region
      %72 = dma.done [#allocation3], 128
    $region25: #{tpu_custom_call.1} parent=1 // pred_fallthru
      _
    // Predicated region
    $region26: #{tpu_custom_call.1} parent=1 // pred_check
      _
    $region27: #{tpu_custom_call.1} parent=1 // pred_check_branch
      %74 = sbr.rel (0) target = $region29
    $region28: #{tpu_custom_call.1} parent=1 // pred_region
      %75 = dma.done [#allocation6], 128
    $region29: #{tpu_custom_call.1} parent=1 // pred_fallthru
      _
    // Predicated region
    $region30: #{tpu_custom_call.1} parent=1 // pred_check
      _
    $region31: #{tpu_custom_call.1} parent=1 // pred_check_branch
      %77 = sbr.rel (0) target = $region33
    $region32: #{tpu_custom_call.1} parent=1 // pred_region
      %78 = dma.done [#allocation6], 256
    $region33: #{tpu_custom_call.1} parent=1 // pred_fallthru
      _
    // Predicated region
    $region34: #{tpu_custom_call.1} parent=1 // pred_check
      _
    $region35: #{tpu_custom_call.1} parent=1 // pred_check_branch
      %80 = sbr.rel (0) target = $region37
    $region36: #{tpu_custom_call.1} parent=1 // pred_region
      %81 = dma.done [#allocation9], 512
    $region37: #{tpu_custom_call.1} parent=1 // pred_fallthru
      _
    // Predicated region
    $region38: #{tpu_custom_call.1} parent=1 // pred_check
      _
    $region39: #{tpu_custom_call.1} parent=1 // pred_check_branch
      %83 = sbr.rel (0) target = $region41
    $region40: #{tpu_custom_call.1} parent=1 // pred_region
      %84 = dma.done [#allocation9], 1024
    $region41: #{tpu_custom_call.1} parent=1 // pred_fallthru
      _
    %v85 = vld [vmem:[#allocation2] sm:$0xff]
    %v86 = vld [vmem:[#allocation5] sm:$0xff]
    %v87 = vld [vmem:[#allocation7] sm:$0xff]
    %v88 = vld [vmem:[#allocation7 + $0x8] sm:$0x1]
    %vm89 = vcmask 72704
    %v91 = vsel %vm89, %v86, 0
    %vm93 = vcmask 1040384
    %v95 = vsel %vm93, %v88, 0
    %97 = vmatprep.subr.mxu0 0.0
    %98 = vmatpush1.msra.mxu0 0.0
    %99 = vmatprep.subr.mxu0 0.0
    %100 = vmatpush1.msra.mxu0 0.0
    %101 = vmatprep.subr.mxu0 0.0
    %102 = vmatpush1.msra.mxu0 0.0
    %103 = vmatprep.subr.mxu0 0.0
    %104 = vmatpush1.msra.mxu0 0.0
    %105 = vmatprep.subr.mxu0 0.0
    %106 = vmatpush1.msra.mxu0 0.0
    %107 = vmatprep.subr.mxu0 0.0
    %108 = vmatpush1.msra.mxu0 0.0
    %109 = vmatprep.subr.mxu0 0.0
    %110 = vmatpush1.msra.mxu0 0.0
    %111 = vmatprep.subr.mxu0 0.0
    %112 = vmatpush1.msra.mxu0 0.0
    %113 = vmatprep.subr.mxu0 0.0
    %114 = vmatpush1.msra.mxu0 0.0
    %115 = vmatprep.subr.mxu0 0.0
    %116 = vmatpush1.msra.mxu0 0.0
    %117 = vmatprep.subr.mxu0 0.0
    %118 = vmatpush1.msra.mxu0 0.0
    %119 = vmatprep.subr.mxu0 0.0
    %120 = vmatpush1.msra.mxu0 0.0
    %121 = vmatprep.subr.mxu0 0.0
    %122 = vmatpush1.msra.mxu0 0.0
    %123 = vmatprep.subr.mxu0 0.0
    %124 = vmatpush1.msra.mxu0 0.0
    %125 = vmatprep.subr.mxu0 0.0
    %126 = vmatpush1.msra.mxu0 %v95
    %127 = vmatprep.subr.mxu0 0.0
    %128 = vmatpush1.msra.mxu0 %v87
    %129 = vmatprep.subr.mxu0 0.0
    %130 = vmatpush2.msra.mxu0 0.0
    %131 = vmatprep.subr.mxu0 0.0
    %132 = vmatpush2.msra.mxu0 0.0
    %133 = vmatprep.subr.mxu0 0.0
    %134 = vmatpush2.msra.mxu0 0.0
    %135 = vmatprep.subr.mxu0 0.0
    %136 = vmatpush2.msra.mxu0 0.0
    %137 = vmatprep.subr.mxu0 0.0
    %138 = vmatpush2.msra.mxu0 0.0
    %139 = vmatprep.subr.mxu0 0.0
    %140 = vmatpush2.msra.mxu0 0.0
    %141 = vmatprep.subr.mxu0 0.0
    %142 = vmatpush2.msra.mxu0 0.0
    %143 = vmatprep.subr.mxu0 0.0
    %144 = vmatpush2.msra.mxu0 0.0
    %145 = vmatprep.subr.mxu0 0.0
    %146 = vmatpush2.msra.mxu0 0.0
    %147 = vmatprep.subr.mxu0 0.0
    %148 = vmatpush2.msra.mxu0 0.0
    %149 = vmatprep.subr.mxu0 0.0
    %150 = vmatpush2.msra.mxu0 0.0
    %151 = vmatprep.subr.mxu0 0.0
    %152 = vmatpush2.msra.mxu0 0.0
    %153 = vmatprep.subr.mxu0 0.0
    %154 = vmatpush2.msra.mxu0 0.0
    %155 = vmatprep.subr.mxu0 0.0
    %156 = vmatpush2.msra.mxu0 0.0
    %157 = vmatprep.subr.mxu0 0.0
    %158 = vmatpush2.msra.mxu0 0.0
    %159 = vmatprep.subr.mxu0 0.0
    %160 = vmatpush2.msra.mxu0 0.0
    %161 = vmatprep.mubr.f32.mxu0 0.0
    %162 = vmatmul.mubr.f32.gmra.mxu0 %v91
    %v163 = vpop.f32.mrf.mxu0
    %v164 = vadd.f32 0.0, %v163
    %v165 = vpop.f32.mrf.mxu0
    %166 = vdwg.mxu0
    %v167 = vsub.f32 %v85, %v164
    %v168 = vmul.f32 %v167, 1.442695
    %v169 = vpow.pop %v168
    %v170 = vld [vmem:[#allocation8] sm:$0xff]
    %v171 = vld [vmem:[#allocation8 + $0x8] sm:$0xff]
    %v172 = vld [vmem:[#allocation8 + $0x10] sm:$0xff]
    %v173 = vld [vmem:[#allocation8 + $0x18] sm:$0x7]
    %vm174 = vcmask 220160
    %v176 = vsel %vm174, %v169, 0
    %vm178 = vcmask 1042432
    %v180 = vsel %vm178, %v173, 0
    %182 = vmatprep.subr.mxu0 0.0
    %183 = vmatpush1.msra.mxu0 0.0
    %184 = vmatprep.subr.mxu0 0.0
    %185 = vmatpush1.msra.mxu0 0.0
    %186 = vmatprep.subr.mxu0 0.0
    %187 = vmatpush1.msra.mxu0 0.0
    %188 = vmatprep.subr.mxu0 0.0
    %189 = vmatpush1.msra.mxu0 0.0
    %190 = vmatprep.subr.mxu0 0.0
    %191 = vmatpush1.msra.mxu0 0.0
    %192 = vmatprep.subr.mxu0 0.0
    %193 = vmatpush1.msra.mxu0 0.0
    %194 = vmatprep.subr.mxu0 0.0
    %195 = vmatpush1.msra.mxu0 0.0
    %196 = vmatprep.subr.mxu0 0.0
    %197 = vmatpush1.msra.mxu0 0.0
    %198 = vmatprep.subr.mxu0 0.0
    %199 = vmatpush1.msra.mxu0 0.0
    %200 = vmatprep.subr.mxu0 0.0
    %201 = vmatpush1.msra.mxu0 0.0
    %202 = vmatprep.subr.mxu0 0.0
    %203 = vmatpush1.msra.mxu0 0.0
    %204 = vmatprep.subr.mxu0 0.0
    %205 = vmatpush1.msra.mxu0 0.0
    %206 = vmatprep.subr.mxu0 0.0
    %207 = vmatpush1.msra.mxu0 %v180
    %208 = vmatprep.subr.mxu0 0.0
    %209 = vmatpush1.msra.mxu0 %v172
    %210 = vmatprep.subr.mxu0 0.0
    %211 = vmatpush1.msra.mxu0 %v171
    %212 = vmatprep.subr.mxu0 0.0
    %213 = vmatpush1.msra.mxu0 %v170
    %214 = vmatprep.subr.mxu0 0.0
    %215 = vmatpush2.msra.mxu0 0.0
    %216 = vmatprep.subr.mxu0 0.0
    %217 = vmatpush2.msra.mxu0 0.0
    %218 = vmatprep.subr.mxu0 0.0
    %219 = vmatpush2.msra.mxu0 0.0
    %220 = vmatprep.subr.mxu0 0.0
    %221 = vmatpush2.msra.mxu0 0.0
    %222 = vmatprep.subr.mxu0 0.0
    %223 = vmatpush2.msra.mxu0 0.0
    %224 = vmatprep.subr.mxu0 0.0
    %225 = vmatpush2.msra.mxu0 0.0
    %226 = vmatprep.subr.mxu0 0.0
    %227 = vmatpush2.msra.mxu0 0.0
    %228 = vmatprep.subr.mxu0 0.0
    %229 = vmatpush2.msra.mxu0 0.0
    %230 = vmatprep.subr.mxu0 0.0
    %231 = vmatpush2.msra.mxu0 0.0
    %232 = vmatprep.subr.mxu0 0.0
    %233 = vmatpush2.msra.mxu0 0.0
    %234 = vmatprep.subr.mxu0 0.0
    %235 = vmatpush2.msra.mxu0 0.0
    %236 = vmatprep.subr.mxu0 0.0
    %237 = vmatpush2.msra.mxu0 0.0
    %238 = vmatprep.subr.mxu0 0.0
    %239 = vmatpush2.msra.mxu0 0.0
    %240 = vmatprep.subr.mxu0 0.0
    %241 = vmatpush2.msra.mxu0 0.0
    %242 = vmatprep.subr.mxu0 0.0
    %243 = vmatpush2.msra.mxu0 0.0
    %244 = vmatprep.subr.mxu0 0.0
    %245 = vmatpush2.msra.mxu0 0.0
    %246 = vmatprep.mubr.f32.mxu0 0.0
    %247 = vmatmul.mubr.f32.gmra.mxu0 %v176
    %v248 = vpop.f32.mrf.mxu0
    %v249 = vadd.f32 0.0, %v248
    %v250 = vpop.f32.mrf.mxu0
    %251 = vdwg.mxu0
    %v252 = vrcp.pop %v249
    %v253 = vmul.f32 %v169, %v252
    %v254 = vld [vmem:[#allocation10] sm:$0xff]
    %v255 = vld [vmem:[#allocation10 + $0x8] sm:$0xff]
    %v256 = vld [vmem:[#allocation10 + $0x10] sm:$0xff]
    %v257 = vld [vmem:[#allocation10 + $0x18] sm:$0xff]
    %v258 = vld [vmem:[#allocation10 + $0x20] sm:$0xff]
    %v259 = vld [vmem:[#allocation10 + $0x28] sm:$0xff]
    %v260 = vld [vmem:[#allocation10 + $0x30] sm:$0x7]
    %v261 = vld [vmem:[#allocation10 + $0x38] sm:$0x7]
    %v263 = vsel %vm174, %v253, 0
    %v266 = vsel %vm178, %v260, 0
    %v269 = vsel %vm178, %v261, 0
    %271 = vmatprep.subr.mxu0 0.0
    %272 = vmatpush1.msra.mxu0 0.0
    %273 = vmatprep.subr.mxu0 0.0
    %274 = vmatpush1.msra.mxu0 0.0
    %275 = vmatprep.subr.mxu0 0.0
    %276 = vmatpush1.msra.mxu0 0.0
    %277 = vmatprep.subr.mxu0 0.0
    %278 = vmatpush1.msra.mxu0 0.0
    %279 = vmatprep.subr.mxu0 0.0
    %280 = vmatpush1.msra.mxu0 0.0
    %281 = vmatprep.subr.mxu0 0.0
    %282 = vmatpush1.msra.mxu0 0.0
    %283 = vmatprep.subr.mxu0 0.0
    %284 = vmatpush1.msra.mxu0 0.0
    %285 = vmatprep.subr.mxu0 0.0
    %286 = vmatpush1.msra.mxu0 0.0
    %287 = vmatprep.subr.mxu0 0.0
    %288 = vmatpush1.msra.mxu0 0.0
    %289 = vmatprep.subr.mxu0 0.0
    %290 = vmatpush1.msra.mxu0 0.0
    %291 = vmatprep.subr.mxu0 0.0
    %292 = vmatpush1.msra.mxu0 0.0
    %293 = vmatprep.subr.mxu0 0.0
    %294 = vmatpush1.msra.mxu0 0.0
    %295 = vmatprep.subr.mxu0 %v269
    %296 = vmatpush1.msra.mxu0 %v266
    %297 = vmatprep.subr.mxu0 %v259
    %298 = vmatpush1.msra.mxu0 %v258
    %299 = vmatprep.subr.mxu0 %v257
    %300 = vmatpush1.msra.mxu0 %v256
    %301 = vmatprep.subr.mxu0 %v255
    %302 = vmatpush1.msra.mxu0 %v254
    %303 = vmatprep.subr.mxu0 0.0
    %304 = vmatpush2.msra.mxu0 0.0
    %305 = vmatprep.subr.mxu0 0.0
    %306 = vmatpush2.msra.mxu0 0.0
    %307 = vmatprep.subr.mxu0 0.0
    %308 = vmatpush2.msra.mxu0 0.0
    %309 = vmatprep.subr.mxu0 0.0
    %310 = vmatpush2.msra.mxu0 0.0
    %311 = vmatprep.subr.mxu0 0.0
    %312 = vmatpush2.msra.mxu0 0.0
    %313 = vmatprep.subr.mxu0 0.0
    %314 = vmatpush2.msra.mxu0 0.0
    %315 = vmatprep.subr.mxu0 0.0
    %316 = vmatpush2.msra.mxu0 0.0
    %317 = vmatprep.subr.mxu0 0.0
    %318 = vmatpush2.msra.mxu0 0.0
    %319 = vmatprep.subr.mxu0 0.0
    %320 = vmatpush2.msra.mxu0 0.0
    %321 = vmatprep.subr.mxu0 0.0
    %322 = vmatpush2.msra.mxu0 0.0
    %323 = vmatprep.subr.mxu0 0.0
    %324 = vmatpush2.msra.mxu0 0.0
    %325 = vmatprep.subr.mxu0 0.0
    %326 = vmatpush2.msra.mxu0 0.0
    %327 = vmatprep.subr.mxu0 0.0
    %328 = vmatpush2.msra.mxu0 0.0
    %329 = vmatprep.subr.mxu0 0.0
    %330 = vmatpush2.msra.mxu0 0.0
    %331 = vmatprep.subr.mxu0 0.0
    %332 = vmatpush2.msra.mxu0 0.0
    %333 = vmatprep.subr.mxu0 0.0
    %334 = vmatpush2.msra.mxu0 0.0
    %335 = vmatprep.mubr.f32.mxu0 0.0
    %336 = vmatmul.mubr.f32.gmra.mxu0 %v263
    %v337 = vpop.f32.mrf.mxu0
    %v338 = vadd.f32 0.0, %v337
    %v339 = vpop.f32.mrf.mxu0
    %v340 = vadd.f32 0.0, %v339
    %341 = vdwg.mxu0
    %342 = vst [vmem:[#allocation11] sm:$0xff] %v338
    %343 = vst [vmem:[#allocation11 + $0x8] sm:$0xff] %v340
    // Predicated region
    $region42: #{tpu_custom_call.1} parent=1 // pred_check
      _
    $region43: #{tpu_custom_call.1} parent=1 // pred_check_branch
      %345 = sbr.rel (0) target = $region45
    $region44: #{tpu_custom_call.1} parent=1 // pred_region
      %s347 = ssub.s32 256, 256
      %348 = vsyncadd [#allocation4], %s347
      %s350 = sshll.u32 [#allocation11], 4
      %s351 = int_to_ptr.vmem [resolvable:$true] %s350
      %353 = dma.vmem_to_hbm [thread:$0]  %s351, 256, %s5, [#allocation4]
    $region45: #{tpu_custom_call.1} parent=1 // pred_fallthru
      _
    // Predicated region
    $region46: #{tpu_custom_call.1} parent=1 // pred_check
      _
    $region47: #{tpu_custom_call.1} parent=1 // pred_check_branch
      %355 = sbr.rel (0) target = $region49
    $region48: #{tpu_custom_call.1} parent=1 // pred_region
      %356 = dma.done [#allocation4], 256
    $region49: #{tpu_custom_call.1} parent=1 // pred_fallthru
      _
    %357 = vsyncpa [#allocation3], 1
    %358 = vsyncpa [#allocation6], 1
    %359 = vsyncpa [#allocation9], 1
    %360 = vsyncpa [#allocation4], 1

</llo_original>
